<compile_context>
chip_gen: v6e
topology: v6e:2x2x1
jax: 0.10.0
libtpu: 0.0.40
codegen_flags: <defaults>
</compile_context>

<pallas_src>
import functools

import jax
import jax.numpy as jnp
from jax.experimental import pallas as pl
from jax.experimental.pallas import tpu as pltpu

LANE = 128  # kept for reference; channel padding below is sublane-granular.


def _round_up(x, m):
    return (x + m - 1) // m * m


# ----------------------------------------------------------------------------
# Fused Pallas kernel: the entire forward pass for one graph per grid step.
# ----------------------------------------------------------------------------
def _fused_gnn_kernel(a_ref, x_ref, w_ref, b_ref, o_ref, *,
                      layers_pre_mp, layers_mp):
    """Fused GNN forward for one graph (grid step).

    a_ref : [1, Np, Np]   normalized adjacency (matmul dtype, resident for all layers)
    x_ref : [1, Np, C]    zero-padded node features (matmul dtype)
    w_ref : [L, C, C]     stacked zero-padded weights (matmul dtype, resident across grid)
    b_ref : [L, 1, C]     stacked zero-padded biases (f32)
    o_ref : [1, Np, C]    output (f32; only [:glob, :dim_out] is meaningful)
    """
    f32 = jnp.float32
    mm_dtype = x_ref.dtype
    a = a_ref[0]                                   # [Np, Np]
    x = x_ref[0]                                   # [Np, C]

    li = 0
    # pre_mp: Linear -> ReLU (final_act=True)
    for _ in range(layers_pre_mp):
        y = jnp.dot(x, w_ref[li], preferred_element_type=f32)
        x = jnp.maximum(y + b_ref[li], 0.0).astype(mm_dtype)   # f32 epilogue
        li += 1

    # mp: GCNConv -> ReLU.  XW first (contract to the smaller channel dim
    # before the N^2 aggregation), then aggregate with A_norm.
    for _ in range(layers_mp):
        xw = jnp.dot(x, w_ref[li], preferred_element_type=f32)
        y = jnp.dot(a, xw.astype(mm_dtype), preferred_element_type=f32)
        x = jnp.maximum(y + b_ref[li], 0.0).astype(mm_dtype)
        li += 1

    # post_mp: node head, single Linear, no activation.
    y = jnp.dot(x, w_ref[li], preferred_element_type=f32)
    o_ref[0] = (y + b_ref[li]).astype(o_ref.dtype)


# ----------------------------------------------------------------------------
# Model glue (padding, adjacency normalization, parameter packing) — plain JAX
# ----------------------------------------------------------------------------
def normalize_adjacency(adj):
    """D^{-1/2} (A + I) D^{-1/2} for a dense adjacency matrix."""
    n = adj.shape[0]
    a_hat = adj + jnp.eye(n, dtype=adj.dtype)
    deg = jnp.sum(a_hat, axis=1)
    d_inv_sqrt = 1.0 / jnp.sqrt(jnp.maximum(deg, 1e-12))
    return a_hat * d_inv_sqrt[:, None] * d_inv_sqrt[None, :]


def init_gnn_params(key, dim_in, dim_inner, dim_out, layers_pre_mp, layers_mp):
    """Deterministic Xavier-uniform-style init matching the module's layer shapes."""
    params = {"pre_mp": [], "mp": [], "post_mp": None}

    def xavier(k, fan_in, fan_out):
        lim = jnp.sqrt(6.0 / (fan_in + fan_out))
        return jax.random.uniform(k, (fan_in, fan_out), jnp.float32, -lim, lim)

    d = dim_in
    for _ in range(layers_pre_mp):
        key, kw = jax.random.split(key)
        params["pre_mp"].append((xavier(kw, d, dim_inner),
                                 jnp.zeros((1, dim_inner), jnp.float32)))
        d = dim_inner
    for _ in range(layers_mp):
        key, kw = jax.random.split(key)
        params["mp"].append((xavier(kw, d, dim_inner),
                             jnp.zeros((1, dim_inner), jnp.float32)))
        d = dim_inner
    key, kw = jax.random.split(key)
    params["post_mp"] = (xavier(kw, d, dim_out),
                         jnp.zeros((1, dim_out), jnp.float32))
    return params


def fused_gnn_forward(node_feature, adj, params, *, matmul_dtype=jnp.bfloat16):
    """Full GNN forward: one pallas_call, grid over the batch of graphs.

    node_feature : [B, glob, dim_in]  (already reshape_to_fill'ed: pad nodes are zero)
    adj          : [B, glob, glob]    dense adjacency per graph
    """
    batch, glob, dim_in = node_feature.shape
    dim_out = params["post_mp"][0].shape[1]
    layers_pre_mp = len(params["pre_mp"])
    layers_mp = len(params["mp"])
    all_layers = list(params["pre_mp"]) + list(params["mp"]) + [params["post_mp"]]
    n_layers = len(all_layers)

    # Sublane-align the node count; pad channel dims only to a multiple of 8
    # (bounded padding — the weight stack shrinks ~32x vs. 128-lane f32 padding).
    n_pad = _round_up(glob, 8)
    c_pad = _round_up(max([dim_in, dim_out] + [w.shape[1] for w, _ in all_layers]), 8)

    # Node features: real nodes then zeros; cast to the matmul dtype in the wrapper
    # so the DMA moves half the bytes and the kernel does no per-layer convert of X.
    x0 = jnp.zeros((batch, n_pad, c_pad), jnp.float32)
    x0 = x0.at[:, :glob, :dim_in].set(node_feature).astype(matmul_dtype)

    # Normalized adjacency per graph; zero rows/cols for sublane-pad nodes keep
    # them decoupled from real ones.  Cast once in the wrapper (no f32+bf16 dual
    # copy of A in VMEM).
    a_norm = jax.vmap(normalize_adjacency)(adj)
    a_pad = jnp.zeros((batch, n_pad, n_pad), jnp.float32)
    a_pad = a_pad.at[:, :glob, :glob].set(a_norm).astype(matmul_dtype)

    # Stack zero-padded weights/biases so every layer is a uniform [C, C]/[1, C].
    # Weights travel in the matmul dtype; biases stay f32 (tiny, keeps the
    # bias+ReLU epilogue in f32 — required on v5e, harmless on v6e/v7x).
    w_all = jnp.zeros((n_layers, c_pad, c_pad), jnp.float32)
    b_all = jnp.zeros((n_layers, 1, c_pad), jnp.float32)
    for i, (w, b) in enumerate(all_layers):
        w_all = w_all.at[i, :w.shape[0], :w.shape[1]].set(w)
        b_all = b_all.at[i, :, :b.shape[1]].set(b)
    w_all = w_all.astype(matmul_dtype)

    mm_itemsize = jnp.ones((), matmul_dtype).dtype.itemsize
    flops = int(batch * (2 * n_pad * c_pad * c_pad * (layers_pre_mp + layers_mp + 1)
                         + 2 * n_pad * n_pad * c_pad * layers_mp))
    bytes_accessed = int(batch * n_pad * n_pad * mm_itemsize     # A
                         + batch * n_pad * c_pad * mm_itemsize   # X
                         + n_layers * c_pad * c_pad * mm_itemsize  # W (resident)
                         + n_layers * c_pad * 4                  # b
                         + batch * n_pad * c_pad * 4)            # out

    kernel = functools.partial(_fused_gnn_kernel,
                               layers_pre_mp=layers_pre_mp,
                               layers_mp=layers_mp)

    out = pl.pallas_call(
        kernel,
        out_shape=jax.ShapeDtypeStruct((batch, n_pad, c_pad), jnp.float32),
        grid=(batch,),
        in_specs=[
            pl.BlockSpec((1, n_pad, n_pad), lambda i: (i, 0, 0)),        # A_norm[i]
            pl.BlockSpec((1, n_pad, c_pad), lambda i: (i, 0, 0)),        # X[i]
            pl.BlockSpec((n_layers, c_pad, c_pad), lambda i: (0, 0, 0)),  # W (resident)
            pl.BlockSpec((n_layers, 1, c_pad), lambda i: (0, 0, 0)),      # b (resident)
        ],
        out_specs=pl.BlockSpec((1, n_pad, c_pad), lambda i: (i, 0, 0)),
        compiler_params=pltpu.CompilerParams(
            dimension_semantics=("parallel",),           # megacore / v7x 2nd TC
            vmem_limit_bytes=32 * 1024 * 1024),          # scoped-VMEM hygiene
        cost_estimate=pl.CostEstimate(flops=flops, transcendentals=0,
                                      bytes_accessed=bytes_accessed),
    )(a_pad, x0, w_all, b_all)

    return out[:, :glob, :dim_out]


# Pure-JAX reference for the sanity check.
def gnn_forward_ref(node_feature, adj, params):
    def one_graph(x, a):
        a_norm = normalize_adjacency(a)
        for w, b in params["pre_mp"]:
            x = jnp.maximum(x @ w + b, 0.0)
        for w, b in params["mp"]:
            x = jnp.maximum(a_norm @ (x @ w) + b, 0.0)
        w, b = params["post_mp"]
        return x @ w + b
    return jax.vmap(one_graph)(node_feature, adj)


if __name__ == "__main__":
    # Small synthetic problem consistent with the module's forward:
    # a batch of graphs, each with `subnodes[i]` real nodes padded (ReshapeH)
    # to `glob_shape` global nodes.
    batch = 2
    glob_shape = 64          # global node count (ReshapeH target)
    subnodes = (48, 56)      # actual nodes per sample
    dim_in = 16              # input node-feature dim
    dim_inner = 32           # cfg.gnn.dim_inner
    dim_out = 8              # prediction dim
    layers_pre_mp = 1        # cfg.gnn.layers_pre_mp
    layers_mp = 2            # cfg.gnn.layers_mp

    key = jax.random.PRNGKey(0)
    k_feat, k_adj, k_param = jax.random.split(key, 3)

    # ReshapeH.reshape_to_fill: per-sample features, zero-padded to glob_shape.
    feats = jax.random.normal(k_feat, (batch, glob_shape, dim_in), jnp.float32)
    node_mask = jnp.arange(glob_shape)[None, :] < jnp.asarray(subnodes)[:, None]
    node_feature = feats * node_mask[:, :, None]

    # Deterministic random symmetric adjacencies (no self-loops), restricted to
    # each graph's real nodes.
    a_rand = jax.random.uniform(k_adj, (batch, glob_shape, glob_shape))
    adj = ((a_rand + jnp.swapaxes(a_rand, 1, 2)) > 1.4).astype(jnp.float32)
    adj = adj * (1.0 - jnp.eye(glob_shape, dtype=jnp.float32))[None]
    pair_mask = node_mask[:, :, None] * node_mask[:, None, :]
    adj = adj * pair_mask

    params = init_gnn_params(k_param, dim_in, dim_inner, dim_out,
                             layers_pre_mp, layers_mp)

    ref = jax.block_until_ready(gnn_forward_ref(node_feature, adj, params))

    # f32 MXU inputs: tight semantic check against the pure-JAX reference.
    out_f32 = jax.block_until_ready(
        fused_gnn_forward(node_feature, adj, params, matmul_dtype=jnp.float32))
    assert out_f32.shape == (batch, glob_shape, dim_out)
    assert jnp.allclose(out_f32, ref, atol=2e-2, rtol=2e-2)

    # bf16 MXU inputs with f32 accumulation (fast path on all gens): looser check.
    out_bf16 = jax.block_until_ready(
        fused_gnn_forward(node_feature, adj, params, matmul_dtype=jnp.bfloat16))
    assert out_bf16.shape == (batch, glob_shape, dim_out)
    assert jnp.allclose(out_bf16, ref, atol=6e-2, rtol=6e-2)

    print("KERNEL_OK")
</pallas_src>

<mosaic_0001>
module attributes {stable_mosaic.version = 11 : i64} {
  func.func @_fused_gnn_kernel(%arg0: i32, %arg1: memref<1x64x64xf32, #tpu.memory_space<vmem>>, %arg2: memref<1x64x32xf32, #tpu.memory_space<vmem>>, %arg3: memref<4x32x32xf32, #tpu.memory_space<vmem>>, %arg4: memref<4x1x32xf32, #tpu.memory_space<vmem>>, %arg5: memref<1x64x32xf32, #tpu.memory_space<vmem>>) attributes {dimension_semantics = [#tpu.dimension_semantics<parallel>], iteration_bounds = array<i64: 2>, scalar_prefetch = 0 : i64, scratch_operands = 0 : i64, tpu.core_type = #tpu.core_type<tc>, window_params = [{transform_indices = @transform_0, window_bounds = array<i64: 1, 64, 64>}, {transform_indices = @transform_1, window_bounds = array<i64: 1, 64, 32>}, {pipeline_mode = #tpu.pipeline_mode<synchronous>, transform_indices = @transform_2, window_bounds = array<i64: 4, 32, 32>}, {pipeline_mode = #tpu.pipeline_mode<synchronous>, transform_indices = @transform_3, window_bounds = array<i64: 4, 1, 32>}, {transform_indices = @transform_4, window_bounds = array<i64: 1, 64, 32>}]} {
    %c0 = arith.constant 0 : index
    %c0_0 = arith.constant 0 : index
    %c0_1 = arith.constant 0 : index
    %0 = vector.load %arg1[%c0, %c0_0, %c0_1] : memref<1x64x64xf32, #tpu.memory_space<vmem>>, vector<1x64x64xf32>
    %1 = vector.shape_cast %0 : vector<1x64x64xf32> to vector<64x64xf32>
    %c0_2 = arith.constant 0 : index
    %c0_3 = arith.constant 0 : index
    %c0_4 = arith.constant 0 : index
    %2 = vector.load %arg2[%c0_2, %c0_3, %c0_4] : memref<1x64x32xf32, #tpu.memory_space<vmem>>, vector<1x64x32xf32>
    %3 = vector.shape_cast %2 : vector<1x64x32xf32> to vector<64x32xf32>
    %c0_5 = arith.constant 0 : index
    %c0_6 = arith.constant 0 : index
    %c0_7 = arith.constant 0 : index
    %4 = vector.load %arg3[%c0_5, %c0_6, %c0_7] : memref<4x32x32xf32, #tpu.memory_space<vmem>>, vector<1x32x32xf32>
    %5 = vector.shape_cast %4 : vector<1x32x32xf32> to vector<32x32xf32>
    %cst = arith.constant dense<0.000000e+00> : vector<64x32xf32>
    %6 = tpu.matmul %3, %5, %cst {dimension_numbers = #tpu.dot_dimension_numbers<[1], [0], [0], [1], [0, 0, 1, 1], [], []>} : vector<64x32xf32>, vector<32x32xf32>, vector<64x32xf32> -> vector<64x32xf32>
    %c0_8 = arith.constant 0 : index
    %c0_9 = arith.constant 0 : index
    %c0_10 = arith.constant 0 : index
    %7 = vector.load %arg4[%c0_8, %c0_9, %c0_10] : memref<4x1x32xf32, #tpu.memory_space<vmem>>, vector<1x1x32xf32>
    %8 = vector.shape_cast %7 : vector<1x1x32xf32> to vector<1x32xf32>
    %9 = vector.broadcast %8 : vector<1x32xf32> to vector<64x32xf32>
    %10 = arith.addf %6, %9 : vector<64x32xf32>
    %cst_11 = arith.constant 0.000000e+00 : f32
    %11 = vector.broadcast %cst_11 : f32 to vector<64x32xf32>
    %12 = arith.maximumf %10, %11 : vector<64x32xf32>
    %c1 = arith.constant 1 : index
    %c0_12 = arith.constant 0 : index
    %c0_13 = arith.constant 0 : index
    %13 = vector.load %arg3[%c1, %c0_12, %c0_13] : memref<4x32x32xf32, #tpu.memory_space<vmem>>, vector<1x32x32xf32>
    %14 = vector.shape_cast %13 : vector<1x32x32xf32> to vector<32x32xf32>
    %cst_14 = arith.constant dense<0.000000e+00> : vector<64x32xf32>
    %15 = tpu.matmul %12, %14, %cst_14 {dimension_numbers = #tpu.dot_dimension_numbers<[1], [0], [0], [1], [0, 0, 1, 1], [], []>} : vector<64x32xf32>, vector<32x32xf32>, vector<64x32xf32> -> vector<64x32xf32>
    %cst_15 = arith.constant dense<0.000000e+00> : vector<64x32xf32>
    %16 = tpu.matmul %1, %15, %cst_15 {dimension_numbers = #tpu.dot_dimension_numbers<[1], [0], [0], [1], [0, 0, 1, 1], [], []>} : vector<64x64xf32>, vector<64x32xf32>, vector<64x32xf32> -> vector<64x32xf32>
    %c1_16 = arith.constant 1 : index
    %c0_17 = arith.constant 0 : index
    %c0_18 = arith.constant 0 : index
    %17 = vector.load %arg4[%c1_16, %c0_17, %c0_18] : memref<4x1x32xf32, #tpu.memory_space<vmem>>, vector<1x1x32xf32>
    %18 = vector.shape_cast %17 : vector<1x1x32xf32> to vector<1x32xf32>
    %19 = vector.broadcast %18 : vector<1x32xf32> to vector<64x32xf32>
    %20 = arith.addf %16, %19 : vector<64x32xf32>
    %cst_19 = arith.constant 0.000000e+00 : f32
    %21 = vector.broadcast %cst_19 : f32 to vector<64x32xf32>
    %22 = arith.maximumf %20, %21 : vector<64x32xf32>
    %c2 = arith.constant 2 : index
    %c0_20 = arith.constant 0 : index
    %c0_21 = arith.constant 0 : index
    %23 = vector.load %arg3[%c2, %c0_20, %c0_21] : memref<4x32x32xf32, #tpu.memory_space<vmem>>, vector<1x32x32xf32>
    %24 = vector.shape_cast %23 : vector<1x32x32xf32> to vector<32x32xf32>
    %cst_22 = arith.constant dense<0.000000e+00> : vector<64x32xf32>
    %25 = tpu.matmul %22, %24, %cst_22 {dimension_numbers = #tpu.dot_dimension_numbers<[1], [0], [0], [1], [0, 0, 1, 1], [], []>} : vector<64x32xf32>, vector<32x32xf32>, vector<64x32xf32> -> vector<64x32xf32>
    %cst_23 = arith.constant dense<0.000000e+00> : vector<64x32xf32>
    %26 = tpu.matmul %1, %25, %cst_23 {dimension_numbers = #tpu.dot_dimension_numbers<[1], [0], [0], [1], [0, 0, 1, 1], [], []>} : vector<64x64xf32>, vector<64x32xf32>, vector<64x32xf32> -> vector<64x32xf32>
    %c2_24 = arith.constant 2 : index
    %c0_25 = arith.constant 0 : index
    %c0_26 = arith.constant 0 : index
    %27 = vector.load %arg4[%c2_24, %c0_25, %c0_26] : memref<4x1x32xf32, #tpu.memory_space<vmem>>, vector<1x1x32xf32>
    %28 = vector.shape_cast %27 : vector<1x1x32xf32> to vector<1x32xf32>
    %29 = vector.broadcast %28 : vector<1x32xf32> to vector<64x32xf32>
    %30 = arith.addf %26, %29 : vector<64x32xf32>
    %cst_27 = arith.constant 0.000000e+00 : f32
    %31 = vector.broadcast %cst_27 : f32 to vector<64x32xf32>
    %32 = arith.maximumf %30, %31 : vector<64x32xf32>
    %c3 = arith.constant 3 : index
    %c0_28 = arith.constant 0 : index
    %c0_29 = arith.constant 0 : index
    %33 = vector.load %arg3[%c3, %c0_28, %c0_29] : memref<4x32x32xf32, #tpu.memory_space<vmem>>, vector<1x32x32xf32>
    %34 = vector.shape_cast %33 : vector<1x32x32xf32> to vector<32x32xf32>
    %cst_30 = arith.constant dense<0.000000e+00> : vector<64x32xf32>
    %35 = tpu.matmul %32, %34, %cst_30 {dimension_numbers = #tpu.dot_dimension_numbers<[1], [0], [0], [1], [0, 0, 1, 1], [], []>} : vector<64x32xf32>, vector<32x32xf32>, vector<64x32xf32> -> vector<64x32xf32>
    %c3_31 = arith.constant 3 : index
    %c0_32 = arith.constant 0 : index
    %c0_33 = arith.constant 0 : index
    %36 = vector.load %arg4[%c3_31, %c0_32, %c0_33] : memref<4x1x32xf32, #tpu.memory_space<vmem>>, vector<1x1x32xf32>
    %37 = vector.shape_cast %36 : vector<1x1x32xf32> to vector<1x32xf32>
    %38 = vector.broadcast %37 : vector<1x32xf32> to vector<64x32xf32>
    %39 = arith.addf %35, %38 : vector<64x32xf32>
    %c0_34 = arith.constant 0 : index
    %c0_35 = arith.constant 0 : index
    %c0_36 = arith.constant 0 : index
    %40 = vector.load %arg5[%c0_34, %c0_35, %c0_36] : memref<1x64x32xf32, #tpu.memory_space<vmem>>, vector<1x64x32xf32>
    %41 = vector.shape_cast %40 : vector<1x64x32xf32> to vector<64x32xf32>
    %42 = vector.shape_cast %39 : vector<64x32xf32> to vector<1x64x32xf32>
    tpu.vector_store %arg5[%c0_34, %c0_35, %c0_36], %42 {strides = array<i32>} : memref<1x64x32xf32, #tpu.memory_space<vmem>>, vector<1x64x32xf32>,
    return
  }
  func.func @transform_0(%arg0: i32) -> (i32, i32, i32) {
    %c0_i32 = arith.constant 0 : i32
    %c0_i32_0 = arith.constant 0 : i32
    %c0_i32_1 = arith.constant 0 : i32
    return %arg0, %c0_i32, %c0_i32_0 : i32, i32, i32
  }
  func.func @transform_1(%arg0: i32) -> (i32, i32, i32) {
    %c0_i32 = arith.constant 0 : i32
    %c0_i32_0 = arith.constant 0 : i32
    %c0_i32_1 = arith.constant 0 : i32
    return %arg0, %c0_i32, %c0_i32_0 : i32, i32, i32
  }
  func.func @transform_2(%arg0: i32) -> (i32, i32, i32) {
    %c0_i32 = arith.constant 0 : i32
    %c0_i32_0 = arith.constant 0 : i32
    %c0_i32_1 = arith.constant 0 : i32
    %c0_i32_2 = arith.constant 0 : i32
    return %c0_i32, %c0_i32_0, %c0_i32_1 : i32, i32, i32
  }
  func.func @transform_3(%arg0: i32) -> (i32, i32, i32) {
    %c0_i32 = arith.constant 0 : i32
    %c0_i32_0 = arith.constant 0 : i32
    %c0_i32_1 = arith.constant 0 : i32
    %c0_i32_2 = arith.constant 0 : i32
    return %c0_i32, %c0_i32_0, %c0_i32_1 : i32, i32, i32
  }
  func.func @transform_4(%arg0: i32) -> (i32, i32, i32) {
    %c0_i32 = arith.constant 0 : i32
    %c0_i32_0 = arith.constant 0 : i32
    %c0_i32_1 = arith.constant 0 : i32
    return %arg0, %c0_i32, %c0_i32_0 : i32, i32, i32
  }
}

</mosaic_0001>

<llo_original>
// kernel: tpu_custom_call.1
$region0: #{tpu_custom_call.1}
  #allocation0 [shape = 'u32[]', space=smem, size = 0x4, offset = 0x4, fixed_abs, tag = 'smem constant byte address 0x4 - core index']
  #allocation1 [shape = 'u32[144,128]{1,0:T(1,128)}', space=vmem, size = 0x12000, scoped, tag = 'internal scratch']
  %s0 = inlined_call_operand.vmem [shape: f32[2,64,64], index: 0, kind: input, shape index: {}]
  %s1 = inlined_call_operand.vmem [shape: f32[2,64,32], index: 1, kind: input, shape index: {}]
  %s2 = inlined_call_operand.hbm [shape: f32[4,32,32], index: 2, kind: input, shape index: {}]
  %s3 = inlined_call_operand.vmem [shape: f32[4,1,32], index: 3, kind: input, shape index: {}]
  %s4 = inlined_call_operand.vmem [shape: f32[2,64,32], index: 4, kind: output, shape index: {}]
  %s5 = sld [smem:[#allocation0]]
  $region53: #{tpu_custom_call.1} parent=0
    _
  %s7 = ssub.s32 1, %s5
  %s8 = scalar_select 0, %s7, %s5
  $region1: #{tpu_custom_call.1} parent=0
    #allocation2 [shape = 'u8[65536]{0}', space=vmem, size = 0x10000, scoped, tag = 'input window, operand 2, single buffered']
    #allocation3 [shape = 's32[2]{0}', space=sflag, size = 0x8, scoped, tag = 'scoped memory for tpu_custom_call.1']
    %9 = vsyncpa [#allocation3], 0
    loop: start=0, step=1, limit=4
    $region2: #{tpu_custom_call.1} parent=1 // loop_pre_header
      _
    $region3: #{tpu_custom_call.1} parent=1 // loop_header
      %s11 = sphi 0, %s15
      %p12 = scmp.ge.s32.totalorder %s11, 4
      %s21 = sphi 0, %s23
      %s24 = sphi 0, %s21
      %s25 = sphi 0, %s24
      %s41 = sphi 0, %s25
      %s47 = sphi 0, %s49
      %s50 = sphi 0, %s47
      %s51 = sphi 0, %s50
      %s67 = sphi 0, %s51
      %s71 = sphi 0, %s71
      %s73 = sphi 0, %s71
      %s74 = sphi 0, %s73
      %s88 = sphi 0, %s74
      %s92 = sphi 0, %s92
      %s94 = sphi 0, %s92
      %s95 = sphi 0, %s94
      %s109 = sphi 0, %s95
      %s115 = sphi 0, %s117
      %s118 = sphi 0, %s115
      %s119 = sphi 0, %s118
      %s135 = sphi 0, %s119
    $region4: #{tpu_custom_call.1} parent=1 // loop_header_branch
      %14 = sbr.rel (%p12) target = $region8
    $region5: #{tpu_custom_call.1} parent=1 // loop_body
      %s16 = ssub.s32 %s11, 1
      %s17 = ssub.s32 %s11, 2
      %s18 = sadd.s32 %s11, 1
      %s19 = ssub.s32 %s11, %s18
      %p20 = scmp.eq.s32.totalorder %s19, 0
      %s22 = sadd.s32 %s21, 1
      %s23 = scalar_select %p20, %s21, %s22
      %p26 = pneg %p20
      %p27 = scmp.eq.s32.totalorder %s11, 1
      %p28 = por %p26, %p27
      %p29 = scmp.ne.s32.totalorder %s21, %s24
      %p30 = scmp.eq.s32.totalorder %s11, 0
      %p31 = por %p29, %p30
      %p32 = scmp.ne.s32.totalorder %s21, %s24
      %p33 = scmp.eq.s32.totalorder %s16, 1
      %p34 = por %p32, %p33
      %p35 = scmp.ne.s32.totalorder %s24, %s25
      %p36 = scmp.eq.s32.totalorder %s16, 0
      %p37 = por %p35, %p36
      %p38 = scmp.ne.s32.totalorder %s24, %s25
      %p39 = scmp.eq.s32.totalorder %s17, 1
      %p40 = por %p38, %p39
      %p42 = scmp.ne.s32.totalorder %s25, %s41
      %p43 = scmp.eq.s32.totalorder %s17, 0
      %p44 = por %p42, %p43
      %s45 = ssub.s32 %s11, %s18
      %p46 = scmp.eq.s32.totalorder %s45, 0
      %s48 = sadd.s32 %s47, 1
      %s49 = scalar_select %p46, %s47, %s48
      %p52 = pneg %p46
      %p53 = scmp.eq.s32.totalorder %s11, 1
      %p54 = por %p52, %p53
      %p55 = scmp.ne.s32.totalorder %s47, %s50
      %p56 = scmp.eq.s32.totalorder %s11, 0
      %p57 = por %p55, %p56
      %p58 = scmp.ne.s32.totalorder %s47, %s50
      %p59 = scmp.eq.s32.totalorder %s16, 1
      %p60 = por %p58, %p59
      %p61 = scmp.ne.s32.totalorder %s50, %s51
      %p62 = scmp.eq.s32.totalorder %s16, 0
      %p63 = por %p61, %p62
      %p64 = scmp.ne.s32.totalorder %s50, %s51
      %p65 = scmp.eq.s32.totalorder %s17, 1
      %p66 = por %p64, %p65
      %p68 = scmp.ne.s32.totalorder %s51, %s67
      %p69 = scmp.eq.s32.totalorder %s17, 0
      %p70 = por %p68, %p69
      %s72 = sadd.s32 %s71, 1
      %p75 = scmp.eq.s32.totalorder %s11, 1
      %p76 = scmp.ne.s32.totalorder %s71, %s73
      %p77 = scmp.eq.s32.totalorder %s11, 0
      %p78 = por %p76, %p77
      %p79 = scmp.ne.s32.totalorder %s71, %s73
      %p80 = scmp.eq.s32.totalorder %s16, 1
      %p81 = por %p79, %p80
      %p82 = scmp.ne.s32.totalorder %s73, %s74
      %p83 = scmp.eq.s32.totalorder %s16, 0
      %p84 = por %p82, %p83
      %p85 = scmp.ne.s32.totalorder %s73, %s74
      %p86 = scmp.eq.s32.totalorder %s17, 1
      %p87 = por %p85, %p86
      %p89 = scmp.ne.s32.totalorder %s74, %s88
      %p90 = scmp.eq.s32.totalorder %s17, 0
      %p91 = por %p89, %p90
      %s93 = sadd.s32 %s92, 1
      %p96 = scmp.eq.s32.totalorder %s11, 1
      %p97 = scmp.ne.s32.totalorder %s92, %s94
      %p98 = scmp.eq.s32.totalorder %s11, 0
      %p99 = por %p97, %p98
      %p100 = scmp.ne.s32.totalorder %s92, %s94
      %p101 = scmp.eq.s32.totalorder %s16, 1
      %p102 = por %p100, %p101
      %p103 = scmp.ne.s32.totalorder %s94, %s95
      %p104 = scmp.eq.s32.totalorder %s16, 0
      %p105 = por %p103, %p104
      %p106 = scmp.ne.s32.totalorder %s94, %s95
      %p107 = scmp.eq.s32.totalorder %s17, 1
      %p108 = por %p106, %p107
      %p110 = scmp.ne.s32.totalorder %s95, %s109
      %p111 = scmp.eq.s32.totalorder %s17, 0
      %p112 = por %p110, %p111
      %s113 = ssub.s32 %s11, %s18
      %p114 = scmp.eq.s32.totalorder %s113, 0
      %s116 = sadd.s32 %s115, 1
      %s117 = scalar_select %p114, %s115, %s116
      %p120 = pneg %p114
      %p121 = scmp.eq.s32.totalorder %s11, 1
      %p122 = por %p120, %p121
      %p123 = scmp.ne.s32.totalorder %s115, %s118
      %p124 = scmp.eq.s32.totalorder %s11, 0
      %p125 = por %p123, %p124
      %p126 = scmp.ne.s32.totalorder %s115, %s118
      %p127 = scmp.eq.s32.totalorder %s16, 1
      %p128 = por %p126, %p127
      %p129 = scmp.ne.s32.totalorder %s118, %s119
      %p130 = scmp.eq.s32.totalorder %s16, 0
      %p131 = por %p129, %p130
      %p132 = scmp.ne.s32.totalorder %s118, %s119
      %p133 = scmp.eq.s32.totalorder %s17, 1
      %p134 = por %p132, %p133
      %p136 = scmp.ne.s32.totalorder %s119, %s135
      %p137 = scmp.eq.s32.totalorder %s17, 0
      %p138 = por %p136, %p137
      %p139 = scmp.le.s32.totalorder 1, %s11
      %p140 = scmp.lt.s32.totalorder %s11, 3
      %p141 = pnand %p139, %p140
      %p142 = pneg %p141
      // Predicated region
      $region9: #{tpu_custom_call.1} parent=5 // pred_check
        _
      $region10: #{tpu_custom_call.1} parent=5 // pred_check_branch
        %144 = sbr.rel (%p141) target = $region12
      $region11: #{tpu_custom_call.1} parent=5 // pred_region
        %s145 = ssub.s32 %s11, 1
        // Predicated region
        $region13: #{tpu_custom_call.1} parent=11 // pred_check
          %p146 = pneg %p84
        $region14: #{tpu_custom_call.1} parent=11 // pred_check_branch
          %148 = sbr.rel (%p146) target = $region16
        $region15: #{tpu_custom_call.1} parent=11 // pred_region
          %s150 = ssub.s32 2048, 2048
          %151 = vsyncadd [#allocation3], %s150
          %s152 = sshll.u32 [#allocation2], 4
          %s153 = int_to_ptr.vmem [resolvable:$true] %s152
          %158 = dma.hbm_to_vmem [thread:$0]  %s2, 2048, %s153, [#allocation3], 128, 128, 8
        $region16: #{tpu_custom_call.1} parent=11 // pred_fallthru
          _
        // Predicated region
        $region17: #{tpu_custom_call.1} parent=11 // pred_check
          %p159 = pneg %p105
        $region18: #{tpu_custom_call.1} parent=11 // pred_check_branch
          %161 = sbr.rel (%p159) target = $region20
        $region19: #{tpu_custom_call.1} parent=11 // pred_region
          _
        $region20: #{tpu_custom_call.1} parent=11 // pred_fallthru
          _
      $region12: #{tpu_custom_call.1} parent=5 // pred_fallthru
        _
      %p162 = scmp.lt.s32.totalorder %s11, 2
      // Predicated region
      $region21: #{tpu_custom_call.1} parent=5 // pred_check
        %p163 = pneg %p162
      $region22: #{tpu_custom_call.1} parent=5 // pred_check_branch
        %165 = sbr.rel (%p163) target = $region24
      $region23: #{tpu_custom_call.1} parent=5 // pred_region
        // Predicated region
        $region25: #{tpu_custom_call.1} parent=23 // pred_check
          %p166 = pneg %p31
        $region26: #{tpu_custom_call.1} parent=23 // pred_check_branch
          %168 = sbr.rel (%p166) target = $region28
        $region27: #{tpu_custom_call.1} parent=23 // pred_region
          %p169 = scmp.lt.s32.totalorder %s11, 1
          %s170 = scalar_select %p169, %s11, 1
          %s171 = smul.addr %s170, 8
          %s172 = smul.addr %s171, 8
          %s173 = scalar_lea.vmem %s0, %s172
        $region28: #{tpu_custom_call.1} parent=23 // pred_fallthru
          _
        // Predicated region
        $region29: #{tpu_custom_call.1} parent=23 // pred_check
          %p174 = pneg %p57
        $region30: #{tpu_custom_call.1} parent=23 // pred_check_branch
          %176 = sbr.rel (%p174) target = $region32
        $region31: #{tpu_custom_call.1} parent=23 // pred_region
          %p177 = scmp.lt.s32.totalorder %s11, 1
          %s178 = scalar_select %p177, %s11, 1
          %s179 = smul.addr %s178, 8
          %s180 = smul.addr %s179, 8
          %s181 = scalar_lea.vmem %s1, %s180
        $region32: #{tpu_custom_call.1} parent=23 // pred_fallthru
          _
      $region24: #{tpu_custom_call.1} parent=5 // pred_fallthru
        _
      %p182 = scmp.le.s32.totalorder 1, %s11
      %p183 = scmp.lt.s32.totalorder %s11, 3
      %p184 = pnand %p182, %p183
      %p185 = pneg %p184
      // Predicated region
      $region33: #{tpu_custom_call.1} parent=5 // pred_check
        _
      $region34: #{tpu_custom_call.1} parent=5 // pred_check_branch
        %187 = sbr.rel (%p184) target = $region36
      $region35: #{tpu_custom_call.1} parent=5 // pred_region
        %s188 = ssub.s32 %s11, 1
        // Predicated region
        $region37: #{tpu_custom_call.1} parent=35 // pred_check
          %p189 = pneg %p84
        $region38: #{tpu_custom_call.1} parent=35 // pred_check_branch
          %191 = sbr.rel (%p189) target = $region40
        $region39: #{tpu_custom_call.1} parent=35 // pred_region
          %192 = dma.done [#allocation3], 2048
        $region40: #{tpu_custom_call.1} parent=35 // pred_fallthru
          _
        %p193 = scmp.lt.s32.totalorder %s16, 1
        %s194 = scalar_select %p193, %s16, 1
        %s195 = smul.addr %s194, 8
        %s196 = smul.addr %s195, 8
        %s197 = scalar_lea.vmem %s0, %s196
        %p198 = pneg %p37
        %p199 = pneg %p34
        %p200 = scmp.lt.s32.totalorder %s16, 1
        %s201 = scalar_select %p200, %s16, 1
        %s202 = smul.addr %s201, 8
        %s203 = smul.addr %s202, 8
        %s204 = scalar_lea.vmem %s1, %s203
        %p205 = pneg %p63
        %p206 = pneg %p60
        %p207 = pneg %p84
        %p208 = pneg %p81
        %p209 = pneg %p105
        %p210 = pneg %p102
        %p211 = pneg %p131
        %p212 = pneg %p128
        %p213 = scmp.lt.s32.totalorder %s16, 1
        %s214 = scalar_select %p213, %s16, 1
        %s215 = smul.addr %s214, 8
        %s216 = smul.addr %s215, 8
        %s217 = scalar_lea.vmem %s4, %s216
        %p218 = scmp.lt.s32.totalorder %s16, 1
        %s219 = scalar_select %p218, %s16, 1
        %s220 = smul.addr %s219, 8
        %s221 = smul.addr %s220, 8
        %s222 = scalar_lea.vmem %s0, %s221
        %p223 = scmp.lt.s32.totalorder %s16, 1
        %s224 = scalar_select %p223, %s16, 1
        %s225 = smul.addr %s224, 8
        %s226 = smul.addr %s225, 8
        %s227 = scalar_lea.vmem %s1, %s226
        %p228 = scmp.lt.s32.totalorder %s16, 1
        %s229 = scalar_select %p228, %s16, 1
        %s230 = smul.addr %s229, 8
        %s231 = smul.addr %s230, 8
        %s232 = scalar_lea.vmem %s4, %s231
        %v233 = vld [vmem:[%s222] sm:$0xff]
        %v234 = vld [vmem:[%s222 + $0x8] sm:$0xff]
        %v235 = vld [vmem:[%s222 + $0x10] sm:$0xff]
        %v236 = vld [vmem:[%s222 + $0x18] sm:$0xff]
        %v237 = vld [vmem:[%s222 + $0x20] sm:$0xff]
        %v238 = vld [vmem:[%s222 + $0x28] sm:$0xff]
        %v239 = vld [vmem:[%s222 + $0x30] sm:$0xff]
        %v240 = vld [vmem:[%s222 + $0x38] sm:$0xff]
        %v241 = vld [vmem:[%s227] sm:$0xff]
        %v242 = vld [vmem:[%s227 + $0x8] sm:$0xff]
        %v243 = vld [vmem:[%s227 + $0x10] sm:$0xff]
        %v244 = vld [vmem:[%s227 + $0x18] sm:$0xff]
        %v245 = vld [vmem:[%s227 + $0x20] sm:$0xff]
        %v246 = vld [vmem:[%s227 + $0x28] sm:$0xff]
        %v247 = vld [vmem:[%s227 + $0x30] sm:$0xff]
        %v248 = vld [vmem:[%s227 + $0x38] sm:$0xff]
        %v249 = vld [vmem:[#allocation2] sm:$0xff]
        %v250 = vld [vmem:[#allocation2 + $0x8] sm:$0xff]
        %v251 = vld [vmem:[#allocation2 + $0x10] sm:$0xff]
        %v252 = vld [vmem:[#allocation2 + $0x18] sm:$0xff]
        %v253 = vld [vmem:[%s3] sm:$0x1]
        %v255 = vlaneseq
        %v256 = vshrl.u32 %v255, 7
        %v257 = vsub.s32 0, %v256
        %v258 = vrot.slane %v253, %v257
        %vm260 = vcmask 261120
        %v262 = vsel %vm260, %v241, 0
        %v265 = vsel %vm260, %v242, 0
        %v268 = vsel %vm260, %v243, 0
        %v271 = vsel %vm260, %v244, 0
        %v274 = vsel %vm260, %v245, 0
        %v277 = vsel %vm260, %v246, 0
        %v280 = vsel %vm260, %v247, 0
        %v283 = vsel %vm260, %v248, 0
        %285 = vmatprep.subr.mxu0 0.0
        %286 = vmatpush1.msra.mxu0 0.0
        %287 = vmatprep.subr.mxu0 0.0
        %288 = vmatpush1.msra.mxu0 0.0
        %289 = vmatprep.subr.mxu0 0.0
        %290 = vmatpush1.msra.mxu0 0.0
        %291 = vmatprep.subr.mxu0 0.0
        %292 = vmatpush1.msra.mxu0 0.0
        %293 = vmatprep.subr.mxu0 0.0
        %294 = vmatpush1.msra.mxu0 0.0
        %295 = vmatprep.subr.mxu0 0.0
        %296 = vmatpush1.msra.mxu0 0.0
        %297 = vmatprep.subr.mxu0 0.0
        %298 = vmatpush1.msra.mxu0 0.0
        %299 = vmatprep.subr.mxu0 0.0
        %300 = vmatpush1.msra.mxu0 0.0
        %301 = vmatprep.subr.mxu0 0.0
        %302 = vmatpush1.msra.mxu0 0.0
        %303 = vmatprep.subr.mxu0 0.0
        %304 = vmatpush1.msra.mxu0 0.0
        %305 = vmatprep.subr.mxu0 0.0
        %306 = vmatpush1.msra.mxu0 0.0
        %307 = vmatprep.subr.mxu0 0.0
        %308 = vmatpush1.msra.mxu0 0.0
        %309 = vmatprep.subr.mxu0 0.0
        %310 = vmatpush1.msra.mxu0 %v252
        %311 = vmatprep.subr.mxu0 0.0
        %312 = vmatpush1.msra.mxu0 %v251
        %313 = vmatprep.subr.mxu0 0.0
        %314 = vmatpush1.msra.mxu0 %v250
        %315 = vmatprep.subr.mxu0 0.0
        %316 = vmatpush1.msra.mxu0 %v249
        %317 = vmatprep.subr.mxu0 0.0
        %318 = vmatpush2.msra.mxu0 0.0
        %319 = vmatprep.subr.mxu0 0.0
        %320 = vmatpush2.msra.mxu0 0.0
        %321 = vmatprep.subr.mxu0 0.0
        %322 = vmatpush2.msra.mxu0 0.0
        %323 = vmatprep.subr.mxu0 0.0
        %324 = vmatpush2.msra.mxu0 0.0
        %325 = vmatprep.subr.mxu0 0.0
        %326 = vmatpush2.msra.mxu0 0.0
        %327 = vmatprep.subr.mxu0 0.0
        %328 = vmatpush2.msra.mxu0 0.0
        %329 = vmatprep.subr.mxu0 0.0
        %330 = vmatpush2.msra.mxu0 0.0
        %331 = vmatprep.subr.mxu0 0.0
        %332 = vmatpush2.msra.mxu0 0.0
        %333 = vmatprep.subr.mxu0 0.0
        %334 = vmatpush2.msra.mxu0 0.0
        %335 = vmatprep.subr.mxu0 0.0
        %336 = vmatpush2.msra.mxu0 0.0
        %337 = vmatprep.subr.mxu0 0.0
        %338 = vmatpush2.msra.mxu0 0.0
        %339 = vmatprep.subr.mxu0 0.0
        %340 = vmatpush2.msra.mxu0 0.0
        %341 = vmatprep.subr.mxu0 0.0
        %342 = vmatpush2.msra.mxu0 0.0
        %343 = vmatprep.subr.mxu0 0.0
        %344 = vmatpush2.msra.mxu0 0.0
        %345 = vmatprep.subr.mxu0 0.0
        %346 = vmatpush2.msra.mxu0 0.0
        %347 = vmatprep.subr.mxu0 0.0
        %348 = vmatpush2.msra.mxu0 0.0
        %349 = vmatprep.mubr.f32.mxu0 0.0
        %350 = vmatmul.mubr.f32.gmra.mxu0 %v262
        %v351 = vpop.f32.mrf.mxu0
        %v352 = vadd.f32 %v258, %v351
        %v353 = vpop.f32.mrf.mxu0
        %354 = vmatprep.mubr.f32.mxu0 0.0
        %355 = vmatmul.mubr.f32.gmra.mxu0 %v265
        %v356 = vpop.f32.mrf.mxu0
        %v357 = vadd.f32 %v258, %v356
        %v358 = vpop.f32.mrf.mxu0
        %359 = vmatprep.mubr.f32.mxu0 0.0
        %360 = vmatmul.mubr.f32.gmra.mxu0 %v268
        %v361 = vpop.f32.mrf.mxu0
        %v362 = vadd.f32 %v258, %v361
        %v363 = vpop.f32.mrf.mxu0
        %364 = vmatprep.mubr.f32.mxu0 0.0
        %365 = vmatmul.mubr.f32.gmra.mxu0 %v271
        %v366 = vpop.f32.mrf.mxu0
        %v367 = vadd.f32 %v258, %v366
        %v368 = vpop.f32.mrf.mxu0
        %369 = vmatprep.mubr.f32.mxu0 0.0
        %370 = vmatmul.mubr.f32.gmra.mxu0 %v274
        %v371 = vpop.f32.mrf.mxu0
        %v372 = vadd.f32 %v258, %v371
        %v373 = vpop.f32.mrf.mxu0
        %374 = vmatprep.mubr.f32.mxu0 0.0
        %375 = vmatmul.mubr.f32.gmra.mxu0 %v277
        %v376 = vpop.f32.mrf.mxu0
        %v377 = vadd.f32 %v258, %v376
        %v378 = vpop.f32.mrf.mxu0
        %379 = vmatprep.mubr.f32.mxu0 0.0
        %380 = vmatmul.mubr.f32.gmra.mxu0 %v280
        %v381 = vpop.f32.mrf.mxu0
        %v382 = vadd.f32 %v258, %v381
        %v383 = vpop.f32.mrf.mxu0
        %384 = vmatprep.mubr.f32.mxu0 0.0
        %385 = vmatmul.mubr.f32.gmra.mxu0 %v283
        %v386 = vpop.f32.mrf.mxu0
        %v387 = vadd.f32 %v258, %v386
        %v388 = vpop.f32.mrf.mxu0
        %389 = vdwg.mxu0
        %v390 = vmax.f32 %v352, 0.0
        %v391 = vmax.f32 %v357, 0.0
        %v392 = vmax.f32 %v362, 0.0
        %v393 = vmax.f32 %v367, 0.0
        %v394 = vmax.f32 %v372, 0.0
        %v395 = vmax.f32 %v377, 0.0
        %v396 = vmax.f32 %v382, 0.0
        %v397 = vmax.f32 %v387, 0.0
        %s398 = scalar_lea.vmem [#allocation2], 32
        %v399 = vld [vmem:[%s398] sm:$0xff]
        %v400 = vld [vmem:[%s398 + $0x8] sm:$0xff]
        %v401 = vld [vmem:[%s398 + $0x10] sm:$0xff]
        %v402 = vld [vmem:[%s398 + $0x18] sm:$0xff]
        %v404 = vsel %vm260, %v390, 0
        %v407 = vsel %vm260, %v391, 0
        %v410 = vsel %vm260, %v392, 0
        %v413 = vsel %vm260, %v393, 0
        %v416 = vsel %vm260, %v394, 0
        %v419 = vsel %vm260, %v395, 0
        %v422 = vsel %vm260, %v396, 0
        %v425 = vsel %vm260, %v397, 0
        %427 = vmatprep.subr.mxu0 0.0
        %428 = vmatpush1.msra.mxu0 0.0
        %429 = vmatprep.subr.mxu0 0.0
        %430 = vmatpush1.msra.mxu0 0.0
        %431 = vmatprep.subr.mxu0 0.0
        %432 = vmatpush1.msra.mxu0 0.0
        %433 = vmatprep.subr.mxu0 0.0
        %434 = vmatpush1.msra.mxu0 0.0
        %435 = vmatprep.subr.mxu0 0.0
        %436 = vmatpush1.msra.mxu0 0.0
        %437 = vmatprep.subr.mxu0 0.0
        %438 = vmatpush1.msra.mxu0 0.0
        %439 = vmatprep.subr.mxu0 0.0
        %440 = vmatpush1.msra.mxu0 0.0
        %441 = vmatprep.subr.mxu0 0.0
        %442 = vmatpush1.msra.mxu0 0.0
        %443 = vmatprep.subr.mxu0 0.0
        %444 = vmatpush1.msra.mxu0 0.0
        %445 = vmatprep.subr.mxu0 0.0
        %446 = vmatpush1.msra.mxu0 0.0
        %447 = vmatprep.subr.mxu0 0.0
        %448 = vmatpush1.msra.mxu0 0.0
        %449 = vmatprep.subr.mxu0 0.0
        %450 = vmatpush1.msra.mxu0 0.0
        %451 = vmatprep.subr.mxu0 0.0
        %452 = vmatpush1.msra.mxu0 %v402
        %453 = vmatprep.subr.mxu0 0.0
        %454 = vmatpush1.msra.mxu0 %v401
        %455 = vmatprep.subr.mxu0 0.0
        %456 = vmatpush1.msra.mxu0 %v400
        %457 = vmatprep.subr.mxu0 0.0
        %458 = vmatpush1.msra.mxu0 %v399
        %459 = vmatprep.subr.mxu0 0.0
        %460 = vmatpush2.msra.mxu0 0.0
        %461 = vmatprep.subr.mxu0 0.0
        %462 = vmatpush2.msra.mxu0 0.0
        %463 = vmatprep.subr.mxu0 0.0
        %464 = vmatpush2.msra.mxu0 0.0
        %465 = vmatprep.subr.mxu0 0.0
        %466 = vmatpush2.msra.mxu0 0.0
        %467 = vmatprep.subr.mxu0 0.0
        %468 = vmatpush2.msra.mxu0 0.0
        %469 = vmatprep.subr.mxu0 0.0
        %470 = vmatpush2.msra.mxu0 0.0
        %471 = vmatprep.subr.mxu0 0.0
        %472 = vmatpush2.msra.mxu0 0.0
        %473 = vmatprep.subr.mxu0 0.0
        %474 = vmatpush2.msra.mxu0 0.0
        %475 = vmatprep.subr.mxu0 0.0
        %476 = vmatpush2.msra.mxu0 0.0
        %477 = vmatprep.subr.mxu0 0.0
        %478 = vmatpush2.msra.mxu0 0.0
        %479 = vmatprep.subr.mxu0 0.0
        %480 = vmatpush2.msra.mxu0 0.0
        %481 = vmatprep.subr.mxu0 0.0
        %482 = vmatpush2.msra.mxu0 0.0
        %483 = vmatprep.subr.mxu0 0.0
        %484 = vmatpush2.msra.mxu0 0.0
        %485 = vmatprep.subr.mxu0 0.0
        %486 = vmatpush2.msra.mxu0 0.0
        %487 = vmatprep.subr.mxu0 0.0
        %488 = vmatpush2.msra.mxu0 0.0
        %489 = vmatprep.subr.mxu0 0.0
        %490 = vmatpush2.msra.mxu0 0.0
        %491 = vmatprep.mubr.f32.mxu0 0.0
        %492 = vmatmul.mubr.f32.gmra.mxu0 %v404
        %v493 = vpop.f32.mrf.mxu0
        %v494 = vadd.f32 0.0, %v493
        %v495 = vpop.f32.mrf.mxu0
        %496 = vmatprep.mubr.f32.mxu0 0.0
        %497 = vmatmul.mubr.f32.gmra.mxu0 %v407
        %v498 = vpop.f32.mrf.mxu0
        %v499 = vadd.f32 0.0, %v498
        %v500 = vpop.f32.mrf.mxu0
        %501 = vmatprep.mubr.f32.mxu0 0.0
        %502 = vmatmul.mubr.f32.gmra.mxu0 %v410
        %v503 = vpop.f32.mrf.mxu0
        %v504 = vadd.f32 0.0, %v503
        %v505 = vpop.f32.mrf.mxu0
        %506 = vmatprep.mubr.f32.mxu0 0.0
        %507 = vmatmul.mubr.f32.gmra.mxu0 %v413
        %v508 = vpop.f32.mrf.mxu0
        %v509 = vadd.f32 0.0, %v508
        %v510 = vpop.f32.mrf.mxu0
        %511 = vmatprep.mubr.f32.mxu0 0.0
        %512 = vmatmul.mubr.f32.gmra.mxu0 %v416
        %v513 = vpop.f32.mrf.mxu0
        %v514 = vadd.f32 0.0, %v513
        %v515 = vpop.f32.mrf.mxu0
        %516 = vmatprep.mubr.f32.mxu0 0.0
        %517 = vmatmul.mubr.f32.gmra.mxu0 %v419
        %v518 = vpop.f32.mrf.mxu0
        %v519 = vadd.f32 0.0, %v518
        %v520 = vpop.f32.mrf.mxu0
        %521 = vmatprep.mubr.f32.mxu0 0.0
        %522 = vmatmul.mubr.f32.gmra.mxu0 %v422
        %v523 = vpop.f32.mrf.mxu0
        %v524 = vadd.f32 0.0, %v523
        %v525 = vpop.f32.mrf.mxu0
        %526 = vmatprep.mubr.f32.mxu0 0.0
        %527 = vmatmul.mubr.f32.gmra.mxu0 %v425
        %v528 = vpop.f32.mrf.mxu0
        %v529 = vadd.f32 0.0, %v528
        %v530 = vpop.f32.mrf.mxu0
        %531 = vdwg.mxu0
        %s532 = scalar_lea.vmem %s3, 1
        %v533 = vld [vmem:[%s532] sm:$0x1]
        %v535 = vlaneseq
        %v536 = vshrl.u32 %v535, 7
        %v537 = vsub.s32 0, %v536
        %v538 = vrot.slane %v533, %v537
        %vm540 = vcmask 523264
        %v542 = vsel %vm540, %v233, 0
        %v545 = vsel %vm540, %v234, 0
        %v548 = vsel %vm540, %v235, 0
        %v551 = vsel %vm540, %v236, 0
        %v554 = vsel %vm540, %v237, 0
        %v557 = vsel %vm540, %v238, 0
        %v560 = vsel %vm540, %v239, 0
        %v563 = vsel %vm540, %v240, 0
        %565 = vmatprep.subr.mxu0 0.0
        %566 = vmatpush1.msra.mxu0 0.0
        %567 = vmatprep.subr.mxu0 0.0
        %568 = vmatpush1.msra.mxu0 0.0
        %569 = vmatprep.subr.mxu0 0.0
        %570 = vmatpush1.msra.mxu0 0.0
        %571 = vmatprep.subr.mxu0 0.0
        %572 = vmatpush1.msra.mxu0 0.0
        %573 = vmatprep.subr.mxu0 0.0
        %574 = vmatpush1.msra.mxu0 0.0
        %575 = vmatprep.subr.mxu0 0.0
        %576 = vmatpush1.msra.mxu0 0.0
        %577 = vmatprep.subr.mxu0 0.0
        %578 = vmatpush1.msra.mxu0 0.0
        %579 = vmatprep.subr.mxu0 0.0
        %580 = vmatpush1.msra.mxu0 0.0
        %581 = vmatprep.subr.mxu0 0.0
        %582 = vmatpush1.msra.mxu0 %v529
        %583 = vmatprep.subr.mxu0 0.0
        %584 = vmatpush1.msra.mxu0 %v524
        %585 = vmatprep.subr.mxu0 0.0
        %586 = vmatpush1.msra.mxu0 %v519
        %587 = vmatprep.subr.mxu0 0.0
        %588 = vmatpush1.msra.mxu0 %v514
        %589 = vmatprep.subr.mxu0 0.0
        %590 = vmatpush1.msra.mxu0 %v509
        %591 = vmatprep.subr.mxu0 0.0
        %592 = vmatpush1.msra.mxu0 %v504
        %593 = vmatprep.subr.mxu0 0.0
        %594 = vmatpush1.msra.mxu0 %v499
        %595 = vmatprep.subr.mxu0 0.0
        %596 = vmatpush1.msra.mxu0 %v494
        %597 = vmatprep.subr.mxu0 0.0
        %598 = vmatpush2.msra.mxu0 0.0
        %599 = vmatprep.subr.mxu0 0.0
        %600 = vmatpush2.msra.mxu0 0.0
        %601 = vmatprep.subr.mxu0 0.0
        %602 = vmatpush2.msra.mxu0 0.0
        %603 = vmatprep.subr.mxu0 0.0
        %604 = vmatpush2.msra.mxu0 0.0
        %605 = vmatprep.subr.mxu0 0.0
        %606 = vmatpush2.msra.mxu0 0.0
        %607 = vmatprep.subr.mxu0 0.0
        %608 = vmatpush2.msra.mxu0 0.0
        %609 = vmatprep.subr.mxu0 0.0
        %610 = vmatpush2.msra.mxu0 0.0
        %611 = vmatprep.subr.mxu0 0.0
        %612 = vmatpush2.msra.mxu0 0.0
        %613 = vmatprep.subr.mxu0 0.0
        %614 = vmatpush2.msra.mxu0 0.0
        %615 = vmatprep.subr.mxu0 0.0
        %616 = vmatpush2.msra.mxu0 0.0
        %617 = vmatprep.subr.mxu0 0.0
        %618 = vmatpush2.msra.mxu0 0.0
        %619 = vmatprep.subr.mxu0 0.0
        %620 = vmatpush2.msra.mxu0 0.0
        %621 = vmatprep.subr.mxu0 0.0
        %622 = vmatpush2.msra.mxu0 0.0
        %623 = vmatprep.subr.mxu0 0.0
        %624 = vmatpush2.msra.mxu0 0.0
        %625 = vmatprep.subr.mxu0 0.0
        %626 = vmatpush2.msra.mxu0 0.0
        %627 = vmatprep.subr.mxu0 0.0
        %628 = vmatpush2.msra.mxu0 0.0
        %629 = vmatprep.mubr.f32.mxu0 0.0
        %630 = vmatmul.mubr.f32.gmra.mxu0 %v542
        %v631 = vpop.f32.mrf.mxu0
        %v632 = vadd.f32 %v538, %v631
        %v633 = vpop.f32.mrf.mxu0
        %634 = vmatprep.mubr.f32.mxu0 0.0
        %635 = vmatmul.mubr.f32.gmra.mxu0 %v545
        %v636 = vpop.f32.mrf.mxu0
        %v637 = vadd.f32 %v538, %v636
        %v638 = vpop.f32.mrf.mxu0
        %639 = vmatprep.mubr.f32.mxu0 0.0
        %640 = vmatmul.mubr.f32.gmra.mxu0 %v548
        %v641 = vpop.f32.mrf.mxu0
        %v642 = vadd.f32 %v538, %v641
        %v643 = vpop.f32.mrf.mxu0
        %644 = vmatprep.mubr.f32.mxu0 0.0
        %645 = vmatmul.mubr.f32.gmra.mxu0 %v551
        %v646 = vpop.f32.mrf.mxu0
        %v647 = vadd.f32 %v538, %v646
        %v648 = vpop.f32.mrf.mxu0
        %649 = vmatprep.mubr.f32.mxu0 0.0
        %650 = vmatmul.mubr.f32.gmra.mxu0 %v554
        %v651 = vpop.f32.mrf.mxu0
        %v652 = vadd.f32 %v538, %v651
        %v653 = vpop.f32.mrf.mxu0
        %654 = vmatprep.mubr.f32.mxu0 0.0
        %655 = vmatmul.mubr.f32.gmra.mxu0 %v557
        %v656 = vpop.f32.mrf.mxu0
        %v657 = vadd.f32 %v538, %v656
        %v658 = vpop.f32.mrf.mxu0
        %659 = vmatprep.mubr.f32.mxu0 0.0
        %660 = vmatmul.mubr.f32.gmra.mxu0 %v560
        %v661 = vpop.f32.mrf.mxu0
        %v662 = vadd.f32 %v538, %v661
        %v663 = vpop.f32.mrf.mxu0
        %664 = vmatprep.mubr.f32.mxu0 0.0
        %665 = vmatmul.mubr.f32.gmra.mxu0 %v563
        %v666 = vpop.f32.mrf.mxu0
        %v667 = vadd.f32 %v538, %v666
        %v668 = vpop.f32.mrf.mxu0
        %669 = vdwg.mxu0
        %v670 = vmax.f32 %v632, 0.0
        %v671 = vmax.f32 %v637, 0.0
        %v672 = vmax.f32 %v642, 0.0
        %v673 = vmax.f32 %v647, 0.0
        %v674 = vmax.f32 %v652, 0.0
        %v675 = vmax.f32 %v657, 0.0
        %v676 = vmax.f32 %v662, 0.0
        %v677 = vmax.f32 %v667, 0.0
        %s678 = scalar_lea.vmem [#allocation2], 64
        %v679 = vld [vmem:[%s678] sm:$0xff]
        %v680 = vld [vmem:[%s678 + $0x8] sm:$0xff]
        %v681 = vld [vmem:[%s678 + $0x10] sm:$0xff]
        %v682 = vld [vmem:[%s678 + $0x18] sm:$0xff]
        %v684 = vsel %vm260, %v670, 0
        %v687 = vsel %vm260, %v671, 0
        %v690 = vsel %vm260, %v672, 0
        %v693 = vsel %vm260, %v673, 0
        %v696 = vsel %vm260, %v674, 0
        %v699 = vsel %vm260, %v675, 0
        %v702 = vsel %vm260, %v676, 0
        %v705 = vsel %vm260, %v677, 0
        %707 = vmatprep.subr.mxu0 0.0
        %708 = vmatpush1.msra.mxu0 0.0
        %709 = vmatprep.subr.mxu0 0.0
        %710 = vmatpush1.msra.mxu0 0.0
        %711 = vmatprep.subr.mxu0 0.0
        %712 = vmatpush1.msra.mxu0 0.0
        %713 = vmatprep.subr.mxu0 0.0
        %714 = vmatpush1.msra.mxu0 0.0
        %715 = vmatprep.subr.mxu0 0.0
        %716 = vmatpush1.msra.mxu0 0.0
        %717 = vmatprep.subr.mxu0 0.0
        %718 = vmatpush1.msra.mxu0 0.0
        %719 = vmatprep.subr.mxu0 0.0
        %720 = vmatpush1.msra.mxu0 0.0
        %721 = vmatprep.subr.mxu0 0.0
        %722 = vmatpush1.msra.mxu0 0.0
        %723 = vmatprep.subr.mxu0 0.0
        %724 = vmatpush1.msra.mxu0 0.0
        %725 = vmatprep.subr.mxu0 0.0
        %726 = vmatpush1.msra.mxu0 0.0
        %727 = vmatprep.subr.mxu0 0.0
        %728 = vmatpush1.msra.mxu0 0.0
        %729 = vmatprep.subr.mxu0 0.0
        %730 = vmatpush1.msra.mxu0 0.0
        %731 = vmatprep.subr.mxu0 0.0
        %732 = vmatpush1.msra.mxu0 %v682
        %733 = vmatprep.subr.mxu0 0.0
        %734 = vmatpush1.msra.mxu0 %v681
        %735 = vmatprep.subr.mxu0 0.0
        %736 = vmatpush1.msra.mxu0 %v680
        %737 = vmatprep.subr.mxu0 0.0
        %738 = vmatpush1.msra.mxu0 %v679
        %739 = vmatprep.subr.mxu0 0.0
        %740 = vmatpush2.msra.mxu0 0.0
        %741 = vmatprep.subr.mxu0 0.0
        %742 = vmatpush2.msra.mxu0 0.0
        %743 = vmatprep.subr.mxu0 0.0
        %744 = vmatpush2.msra.mxu0 0.0
        %745 = vmatprep.subr.mxu0 0.0
        %746 = vmatpush2.msra.mxu0 0.0
        %747 = vmatprep.subr.mxu0 0.0
        %748 = vmatpush2.msra.mxu0 0.0
        %749 = vmatprep.subr.mxu0 0.0
        %750 = vmatpush2.msra.mxu0 0.0
        %751 = vmatprep.subr.mxu0 0.0
        %752 = vmatpush2.msra.mxu0 0.0
        %753 = vmatprep.subr.mxu0 0.0
        %754 = vmatpush2.msra.mxu0 0.0
        %755 = vmatprep.subr.mxu0 0.0
        %756 = vmatpush2.msra.mxu0 0.0
        %757 = vmatprep.subr.mxu0 0.0
        %758 = vmatpush2.msra.mxu0 0.0
        %759 = vmatprep.subr.mxu0 0.0
        %760 = vmatpush2.msra.mxu0 0.0
        %761 = vmatprep.subr.mxu0 0.0
        %762 = vmatpush2.msra.mxu0 0.0
        %763 = vmatprep.subr.mxu0 0.0
        %764 = vmatpush2.msra.mxu0 0.0
        %765 = vmatprep.subr.mxu0 0.0
        %766 = vmatpush2.msra.mxu0 0.0
        %767 = vmatprep.subr.mxu0 0.0
        %768 = vmatpush2.msra.mxu0 0.0
        %769 = vmatprep.subr.mxu0 0.0
        %770 = vmatpush2.msra.mxu0 0.0
        %771 = vmatprep.mubr.f32.mxu0 0.0
        %772 = vmatmul.mubr.f32.gmra.mxu0 %v684
        %v773 = vpop.f32.mrf.mxu0
        %v774 = vadd.f32 0.0, %v773
        %v775 = vpop.f32.mrf.mxu0
        %776 = vmatprep.mubr.f32.mxu0 0.0
        %777 = vmatmul.mubr.f32.gmra.mxu0 %v687
        %v778 = vpop.f32.mrf.mxu0
        %v779 = vadd.f32 0.0, %v778
        %v780 = vpop.f32.mrf.mxu0
        %781 = vmatprep.mubr.f32.mxu0 0.0
        %782 = vmatmul.mubr.f32.gmra.mxu0 %v690
        %v783 = vpop.f32.mrf.mxu0
        %v784 = vadd.f32 0.0, %v783
        %v785 = vpop.f32.mrf.mxu0
        %786 = vmatprep.mubr.f32.mxu0 0.0
        %787 = vmatmul.mubr.f32.gmra.mxu0 %v693
        %v788 = vpop.f32.mrf.mxu0
        %v789 = vadd.f32 0.0, %v788
        %v790 = vpop.f32.mrf.mxu0
        %791 = vmatprep.mubr.f32.mxu0 0.0
        %792 = vmatmul.mubr.f32.gmra.mxu0 %v696
        %v793 = vpop.f32.mrf.mxu0
        %v794 = vadd.f32 0.0, %v793
        %v795 = vpop.f32.mrf.mxu0
        %796 = vmatprep.mubr.f32.mxu0 0.0
        %797 = vmatmul.mubr.f32.gmra.mxu0 %v699
        %v798 = vpop.f32.mrf.mxu0
        %v799 = vadd.f32 0.0, %v798
        %v800 = vpop.f32.mrf.mxu0
        %801 = vmatprep.mubr.f32.mxu0 0.0
        %802 = vmatmul.mubr.f32.gmra.mxu0 %v702
        %v803 = vpop.f32.mrf.mxu0
        %v804 = vadd.f32 0.0, %v803
        %v805 = vpop.f32.mrf.mxu0
        %806 = vmatprep.mubr.f32.mxu0 0.0
        %807 = vmatmul.mubr.f32.gmra.mxu0 %v705
        %v808 = vpop.f32.mrf.mxu0
        %v809 = vadd.f32 0.0, %v808
        %v810 = vpop.f32.mrf.mxu0
        %811 = vdwg.mxu0
        %s812 = scalar_lea.vmem %s3, 2
        %v813 = vld [vmem:[%s812] sm:$0x1]
        %v815 = vlaneseq
        %v816 = vshrl.u32 %v815, 7
        %v817 = vsub.s32 0, %v816
        %v818 = vrot.slane %v813, %v817
        %820 = vmatprep.subr.mxu0 0.0
        %821 = vmatpush1.msra.mxu0 0.0
        %822 = vmatprep.subr.mxu0 0.0
        %823 = vmatpush1.msra.mxu0 0.0
        %824 = vmatprep.subr.mxu0 0.0
        %825 = vmatpush1.msra.mxu0 0.0
        %826 = vmatprep.subr.mxu0 0.0
        %827 = vmatpush1.msra.mxu0 0.0
        %828 = vmatprep.subr.mxu0 0.0
        %829 = vmatpush1.msra.mxu0 0.0
        %830 = vmatprep.subr.mxu0 0.0
        %831 = vmatpush1.msra.mxu0 0.0
        %832 = vmatprep.subr.mxu0 0.0
        %833 = vmatpush1.msra.mxu0 0.0
        %834 = vmatprep.subr.mxu0 0.0
        %835 = vmatpush1.msra.mxu0 0.0
        %836 = vmatprep.subr.mxu0 0.0
        %837 = vmatpush1.msra.mxu0 %v809
        %838 = vmatprep.subr.mxu0 0.0
        %839 = vmatpush1.msra.mxu0 %v804
        %840 = vmatprep.subr.mxu0 0.0
        %841 = vmatpush1.msra.mxu0 %v799
        %842 = vmatprep.subr.mxu0 0.0
        %843 = vmatpush1.msra.mxu0 %v794
        %844 = vmatprep.subr.mxu0 0.0
        %845 = vmatpush1.msra.mxu0 %v789
        %846 = vmatprep.subr.mxu0 0.0
        %847 = vmatpush1.msra.mxu0 %v784
        %848 = vmatprep.subr.mxu0 0.0
        %849 = vmatpush1.msra.mxu0 %v779
        %850 = vmatprep.subr.mxu0 0.0
        %851 = vmatpush1.msra.mxu0 %v774
        %852 = vmatprep.subr.mxu0 0.0
        %853 = vmatpush2.msra.mxu0 0.0
        %854 = vmatprep.subr.mxu0 0.0
        %855 = vmatpush2.msra.mxu0 0.0
        %856 = vmatprep.subr.mxu0 0.0
        %857 = vmatpush2.msra.mxu0 0.0
        %858 = vmatprep.subr.mxu0 0.0
        %859 = vmatpush2.msra.mxu0 0.0
        %860 = vmatprep.subr.mxu0 0.0
        %861 = vmatpush2.msra.mxu0 0.0
        %862 = vmatprep.subr.mxu0 0.0
        %863 = vmatpush2.msra.mxu0 0.0
        %864 = vmatprep.subr.mxu0 0.0
        %865 = vmatpush2.msra.mxu0 0.0
        %866 = vmatprep.subr.mxu0 0.0
        %867 = vmatpush2.msra.mxu0 0.0
        %868 = vmatprep.subr.mxu0 0.0
        %869 = vmatpush2.msra.mxu0 0.0
        %870 = vmatprep.subr.mxu0 0.0
        %871 = vmatpush2.msra.mxu0 0.0
        %872 = vmatprep.subr.mxu0 0.0
        %873 = vmatpush2.msra.mxu0 0.0
        %874 = vmatprep.subr.mxu0 0.0
        %875 = vmatpush2.msra.mxu0 0.0
        %876 = vmatprep.subr.mxu0 0.0
        %877 = vmatpush2.msra.mxu0 0.0
        %878 = vmatprep.subr.mxu0 0.0
        %879 = vmatpush2.msra.mxu0 0.0
        %880 = vmatprep.subr.mxu0 0.0
        %881 = vmatpush2.msra.mxu0 0.0
        %882 = vmatprep.subr.mxu0 0.0
        %883 = vmatpush2.msra.mxu0 0.0
        %884 = vmatprep.mubr.f32.mxu0 0.0
        %885 = vmatmul.mubr.f32.gmra.mxu0 %v542
        %v886 = vpop.f32.mrf.mxu0
        %v887 = vadd.f32 %v818, %v886
        %v888 = vpop.f32.mrf.mxu0
        %889 = vmatprep.mubr.f32.mxu0 0.0
        %890 = vmatmul.mubr.f32.gmra.mxu0 %v545
        %v891 = vpop.f32.mrf.mxu0
        %v892 = vadd.f32 %v818, %v891
        %v893 = vpop.f32.mrf.mxu0
        %894 = vmatprep.mubr.f32.mxu0 0.0
        %895 = vmatmul.mubr.f32.gmra.mxu0 %v548
        %v896 = vpop.f32.mrf.mxu0
        %v897 = vadd.f32 %v818, %v896
        %v898 = vpop.f32.mrf.mxu0
        %899 = vmatprep.mubr.f32.mxu0 0.0
        %900 = vmatmul.mubr.f32.gmra.mxu0 %v551
        %v901 = vpop.f32.mrf.mxu0
        %v902 = vadd.f32 %v818, %v901
        %v903 = vpop.f32.mrf.mxu0
        %904 = vmatprep.mubr.f32.mxu0 0.0
        %905 = vmatmul.mubr.f32.gmra.mxu0 %v554
        %v906 = vpop.f32.mrf.mxu0
        %v907 = vadd.f32 %v818, %v906
        %v908 = vpop.f32.mrf.mxu0
        %909 = vmatprep.mubr.f32.mxu0 0.0
        %910 = vmatmul.mubr.f32.gmra.mxu0 %v557
        %v911 = vpop.f32.mrf.mxu0
        %v912 = vadd.f32 %v818, %v911
        %v913 = vpop.f32.mrf.mxu0
        %914 = vmatprep.mubr.f32.mxu0 0.0
        %915 = vmatmul.mubr.f32.gmra.mxu0 %v560
        %v916 = vpop.f32.mrf.mxu0
        %v917 = vadd.f32 %v818, %v916
        %v918 = vpop.f32.mrf.mxu0
        %919 = vmatprep.mubr.f32.mxu0 0.0
        %920 = vmatmul.mubr.f32.gmra.mxu0 %v563
        %v921 = vpop.f32.mrf.mxu0
        %v922 = vadd.f32 %v818, %v921
        %v923 = vpop.f32.mrf.mxu0
        %924 = vdwg.mxu0
        %v925 = vmax.f32 %v887, 0.0
        %v926 = vmax.f32 %v892, 0.0
        %v927 = vmax.f32 %v897, 0.0
        %v928 = vmax.f32 %v902, 0.0
        %v929 = vmax.f32 %v907, 0.0
        %v930 = vmax.f32 %v912, 0.0
        %v931 = vmax.f32 %v917, 0.0
        %v932 = vmax.f32 %v922, 0.0
        %s933 = scalar_lea.vmem [#allocation2], 96
        %v934 = vld [vmem:[%s933] sm:$0xff]
        %v935 = vld [vmem:[%s933 + $0x8] sm:$0xff]
        %v936 = vld [vmem:[%s933 + $0x10] sm:$0xff]
        %v937 = vld [vmem:[%s933 + $0x18] sm:$0xff]
        %s938 = scalar_lea.vmem %s3, 3
        %v939 = vld [vmem:[%s938] sm:$0x1]
        %v941 = vlaneseq
        %v942 = vshrl.u32 %v941, 7
        %v943 = vsub.s32 0, %v942
        %v944 = vrot.slane %v939, %v943
        %v947 = vsel %vm260, %v925, 0
        %v950 = vsel %vm260, %v926, 0
        %v953 = vsel %vm260, %v927, 0
        %v956 = vsel %vm260, %v928, 0
        %v959 = vsel %vm260, %v929, 0
        %v962 = vsel %vm260, %v930, 0
        %v965 = vsel %vm260, %v931, 0
        %v968 = vsel %vm260, %v932, 0
        %970 = vmatprep.subr.mxu0 0.0
        %971 = vmatpush1.msra.mxu0 0.0
        %972 = vmatprep.subr.mxu0 0.0
        %973 = vmatpush1.msra.mxu0 0.0
        %974 = vmatprep.subr.mxu0 0.0
        %975 = vmatpush1.msra.mxu0 0.0
        %976 = vmatprep.subr.mxu0 0.0
        %977 = vmatpush1.msra.mxu0 0.0
        %978 = vmatprep.subr.mxu0 0.0
        %979 = vmatpush1.msra.mxu0 0.0
        %980 = vmatprep.subr.mxu0 0.0
        %981 = vmatpush1.msra.mxu0 0.0
        %982 = vmatprep.subr.mxu0 0.0
        %983 = vmatpush1.msra.mxu0 0.0
        %984 = vmatprep.subr.mxu0 0.0
        %985 = vmatpush1.msra.mxu0 0.0
        %986 = vmatprep.subr.mxu0 0.0
        %987 = vmatpush1.msra.mxu0 0.0
        %988 = vmatprep.subr.mxu0 0.0
        %989 = vmatpush1.msra.mxu0 0.0
        %990 = vmatprep.subr.mxu0 0.0
        %991 = vmatpush1.msra.mxu0 0.0
        %992 = vmatprep.subr.mxu0 0.0
        %993 = vmatpush1.msra.mxu0 0.0
        %994 = vmatprep.subr.mxu0 0.0
        %995 = vmatpush1.msra.mxu0 %v937
        %996 = vmatprep.subr.mxu0 0.0
        %997 = vmatpush1.msra.mxu0 %v936
        %998 = vmatprep.subr.mxu0 0.0
        %999 = vmatpush1.msra.mxu0 %v935
        %1000 = vmatprep.subr.mxu0 0.0
        %1001 = vmatpush1.msra.mxu0 %v934
        %1002 = vmatprep.subr.mxu0 0.0
        %1003 = vmatpush2.msra.mxu0 0.0
        %1004 = vmatprep.subr.mxu0 0.0
        %1005 = vmatpush2.msra.mxu0 0.0
        %1006 = vmatprep.subr.mxu0 0.0
        %1007 = vmatpush2.msra.mxu0 0.0
        %1008 = vmatprep.subr.mxu0 0.0
        %1009 = vmatpush2.msra.mxu0 0.0
        %1010 = vmatprep.subr.mxu0 0.0
        %1011 = vmatpush2.msra.mxu0 0.0
        %1012 = vmatprep.subr.mxu0 0.0
        %1013 = vmatpush2.msra.mxu0 0.0
        %1014 = vmatprep.subr.mxu0 0.0
        %1015 = vmatpush2.msra.mxu0 0.0
        %1016 = vmatprep.subr.mxu0 0.0
        %1017 = vmatpush2.msra.mxu0 0.0
        %1018 = vmatprep.subr.mxu0 0.0
        %1019 = vmatpush2.msra.mxu0 0.0
        %1020 = vmatprep.subr.mxu0 0.0
        %1021 = vmatpush2.msra.mxu0 0.0
        %1022 = vmatprep.subr.mxu0 0.0
        %1023 = vmatpush2.msra.mxu0 0.0
        %1024 = vmatprep.subr.mxu0 0.0
        %1025 = vmatpush2.msra.mxu0 0.0
        %1026 = vmatprep.subr.mxu0 0.0
        %1027 = vmatpush2.msra.mxu0 0.0
        %1028 = vmatprep.subr.mxu0 0.0
        %1029 = vmatpush2.msra.mxu0 0.0
        %1030 = vmatprep.subr.mxu0 0.0
        %1031 = vmatpush2.msra.mxu0 0.0
        %1032 = vmatprep.subr.mxu0 0.0
        %1033 = vmatpush2.msra.mxu0 0.0
        %1034 = vmatprep.mubr.f32.mxu0 0.0
        %1035 = vmatmul.mubr.f32.gmra.mxu0 %v947
        %v1036 = vpop.f32.mrf.mxu0
        %v1037 = vadd.f32 %v944, %v1036
        %v1038 = vpop.f32.mrf.mxu0
        %1039 = vmatprep.mubr.f32.mxu0 0.0
        %1040 = vmatmul.mubr.f32.gmra.mxu0 %v950
        %v1041 = vpop.f32.mrf.mxu0
        %v1042 = vadd.f32 %v944, %v1041
        %v1043 = vpop.f32.mrf.mxu0
        %1044 = vmatprep.mubr.f32.mxu0 0.0
        %1045 = vmatmul.mubr.f32.gmra.mxu0 %v953
        %v1046 = vpop.f32.mrf.mxu0
        %v1047 = vadd.f32 %v944, %v1046
        %v1048 = vpop.f32.mrf.mxu0
        %1049 = vmatprep.mubr.f32.mxu0 0.0
        %1050 = vmatmul.mubr.f32.gmra.mxu0 %v956
        %v1051 = vpop.f32.mrf.mxu0
        %v1052 = vadd.f32 %v944, %v1051
        %v1053 = vpop.f32.mrf.mxu0
        %1054 = vmatprep.mubr.f32.mxu0 0.0
        %1055 = vmatmul.mubr.f32.gmra.mxu0 %v959
        %v1056 = vpop.f32.mrf.mxu0
        %v1057 = vadd.f32 %v944, %v1056
        %v1058 = vpop.f32.mrf.mxu0
        %1059 = vmatprep.mubr.f32.mxu0 0.0
        %1060 = vmatmul.mubr.f32.gmra.mxu0 %v962
        %v1061 = vpop.f32.mrf.mxu0
        %v1062 = vadd.f32 %v944, %v1061
        %v1063 = vpop.f32.mrf.mxu0
        %1064 = vmatprep.mubr.f32.mxu0 0.0
        %1065 = vmatmul.mubr.f32.gmra.mxu0 %v965
        %v1066 = vpop.f32.mrf.mxu0
        %v1067 = vadd.f32 %v944, %v1066
        %v1068 = vpop.f32.mrf.mxu0
        %1069 = vmatprep.mubr.f32.mxu0 0.0
        %1070 = vmatmul.mubr.f32.gmra.mxu0 %v968
        %v1071 = vpop.f32.mrf.mxu0
        %v1072 = vadd.f32 %v944, %v1071
        %v1073 = vpop.f32.mrf.mxu0
        %1074 = vdwg.mxu0
        %1075 = vst.msk [vmem:[%s232] sm:$0xff] %vm260, %v1037
        %1076 = vst.msk [vmem:[%s232 + $0x8] sm:$0xff] %vm260, %v1042
        %1077 = vst.msk [vmem:[%s232 + $0x10] sm:$0xff] %vm260, %v1047
        %1078 = vst.msk [vmem:[%s232 + $0x18] sm:$0xff] %vm260, %v1052
        %1079 = vst.msk [vmem:[%s232 + $0x20] sm:$0xff] %vm260, %v1057
        %1080 = vst.msk [vmem:[%s232 + $0x28] sm:$0xff] %vm260, %v1062
        %1081 = vst.msk [vmem:[%s232 + $0x30] sm:$0xff] %vm260, %v1067
        %1082 = vst.msk [vmem:[%s232 + $0x38] sm:$0xff] %vm260, %v1072
        %p1083 = scmp.lt.s32.totalorder %s16, 1
        %s1084 = scalar_select %p1083, %s16, 1
        %s1085 = smul.addr %s1084, 8
        %s1086 = smul.addr %s1085, 8
        %s1087 = scalar_lea.vmem %s4, %s1086
        // Predicated region
        $region41: #{tpu_custom_call.1} parent=35 // pred_check
          %p1088 = pneg %p128
        $region42: #{tpu_custom_call.1} parent=35 // pred_check_branch
          %1090 = sbr.rel (%p1088) target = $region44
        $region43: #{tpu_custom_call.1} parent=35 // pred_region
          _
        $region44: #{tpu_custom_call.1} parent=35 // pred_fallthru
          _
      $region36: #{tpu_custom_call.1} parent=5 // pred_fallthru
        _
      %p1091 = scmp.le.s32.totalorder 2, %s11
      // Predicated region
      $region45: #{tpu_custom_call.1} parent=5 // pred_check
        %p1092 = pneg %p1091
      $region46: #{tpu_custom_call.1} parent=5 // pred_check_branch
        %1094 = sbr.rel (%p1092) target = $region48
      $region47: #{tpu_custom_call.1} parent=5 // pred_region
        %s1095 = ssub.s32 %s11, 2
        // Predicated region
        $region49: #{tpu_custom_call.1} parent=47 // pred_check
          %p1096 = pneg %p134
        $region50: #{tpu_custom_call.1} parent=47 // pred_check_branch
          %1098 = sbr.rel (%p1096) target = $region52
        $region51: #{tpu_custom_call.1} parent=47 // pred_region
          %p1099 = scmp.lt.s32.totalorder %s17, 1
          %s1100 = scalar_select %p1099, %s17, 1
          %s1101 = smul.addr %s1100, 8
          %s1102 = smul.addr %s1101, 8
          %s1103 = scalar_lea.vmem %s4, %s1102
        $region52: #{tpu_custom_call.1} parent=47 // pred_fallthru
          _
      $region48: #{tpu_custom_call.1} parent=5 // pred_fallthru
        _
    $region6: #{tpu_custom_call.1} parent=1 // loop_footer
      %s15 = sadd.s32 1, %s11
    $region7: #{tpu_custom_call.1} parent=1 // loop_footer_branch
      %10 = sbr.rel target = $region3
    $region8: #{tpu_custom_call.1} parent=1 // loop_exit
      _
    %1104 = vsyncpa [#allocation3], 1
    %s1105 = scalar_lea.sflag [#allocation3], 1
    %1106 = vsyncpa %s1105, 1

</llo_original>
